<compile_context>
chip_gen: v7x
topology: tpu7x:2x2x1
jax: 0.10.0
libtpu: 0.0.40
codegen_flags: <defaults>
</compile_context>

<pallas_src>
import functools
import math

import jax
import jax.numpy as jnp
from jax import lax
from jax.experimental import pallas as pl
from jax.experimental.pallas import tpu as pltpu


def _round_up(x: int, m: int) -> int:
    return (x + m - 1) // m * m


def _cdiv(a: int, b: int) -> int:
    return (a + b - 1) // b


def _default_row_tile() -> int:
    """Row-tile default per TPU generation (weight-streaming roofline)."""
    try:
        kind = jax.devices()[0].device_kind.lower()
    except Exception:
        return 512
    if "v6" in kind:
        return 1024     # v6e needs ~650-700 flops per streamed weight byte
    if "v5" in kind:
        return 512
    return 512          # v7x (3.2 TB/s HBM -> ~311 flops/byte) and unknown


# ----------------------------------------------------------------------------
# Kernel
# ----------------------------------------------------------------------------
def _mlp_block_kernel(x_ref, w1_ref, b1_ref, w2_ref, b2_ref, o_ref,
                      *acc_scratch, compute_dtype, approximate_gelu):
    # x_ref:  (tm, Dp)   x dtype (cast to compute_dtype in-kernel)
    # w1_ref: (Dp, th)   compute_dtype
    # b1_ref: (1, th)    f32
    # w2_ref: (th, Dp)   compute_dtype
    # b2_ref: (1, Dp)    f32
    # o_ref:  (tm, Dp)   out dtype; resident across the hidden (j) axis
    # acc_scratch: optional (tm, Dp) f32 scratch (only when out dtype != f32)
    acc_ref = acc_scratch[0] if acc_scratch else o_ref
    j = pl.program_id(1)

    @pl.when(j == 0)
    def _():
        acc_ref[...] = jnp.zeros(acc_ref.shape, acc_ref.dtype)

    # lin1 partial: x @ W1[:, j-tile] + b1[j-tile]   (MXU, f32 accumulation)
    x = x_ref[...].astype(compute_dtype)     # in-kernel cast, hidden under MXU
    h = jnp.dot(x, w1_ref[...],
                preferred_element_type=jnp.float32) + b1_ref[...]

    if approximate_gelu:
        # tanh approximation -> routes through the (otherwise idle) EUP slot.
        c = math.sqrt(2.0 / math.pi)
        h = 0.5 * h * (1.0 + jnp.tanh(c * (h + 0.044715 * h * h * h)))
    else:
        # exact erf-based GELU: matches torch.nn.GELU() default.
        h = 0.5 * h * (1.0 + lax.erf(h * (1.0 / math.sqrt(2.0))))

    # lin2 partial: GELU(h) @ W2[j-tile, :], accumulated over the hidden axis.
    acc_ref[...] += jnp.dot(h.astype(w2_ref.dtype), w2_ref[...],
                            preferred_element_type=jnp.float32)

    @pl.when(j == pl.num_programs(1) - 1)
    def _():
        o_ref[...] = (acc_ref[...] + b2_ref[...]).astype(o_ref.dtype)


# ----------------------------------------------------------------------------
# Parameter preparation (call once at module init; hoists pad + cast)
# ----------------------------------------------------------------------------
def prepare_mlp_block_params(w1, b1, w2, b2, *, compute_dtype=jnp.bfloat16,
                             th_target=1024, weight_vmem_budget=24 << 20):
    """Pad and cast MLPBlock parameters once.

    w1: (D, H), b1: (H,), w2: (H, D), b2: (D,).  Weights are stored as
    (in, out), i.e. the transpose of the torch nn.Linear weight.
    """
    D, H = w1.shape
    assert w2.shape == (H, D) and b1.shape == (H,) and b2.shape == (D,)
    compute_dtype = jnp.dtype(compute_dtype)
    c_size = compute_dtype.itemsize

    D_pad = max(_round_up(D, 128), 128)           # lane-dense output dim
    H128 = max(_round_up(H, 128), 128)

    # Hidden tile: split H into n_h roughly-equal tiles of size th (multiple
    # of 128); H is padded to n_h*th with zeros (exact: GELU(0)=0, zero W2
    # rows contribute nothing).  This avoids the old divisor-search collapse.
    th_target = min(th_target, H128)
    n_h = _cdiv(H128, th_target)
    th = _round_up(_cdiv(H128, n_h), 128)
    # Keep the double-buffered W1+W2 tiles inside the weight VMEM budget
    # (matters for v5e's small scoped default and v7x's 64 MiB physical VMEM).
    while th > 128 and 2 * 2 * D_pad * th * c_size > weight_vmem_budget:
        n_h += 1
        th = _round_up(_cdiv(H128, n_h), 128)
    H_pad = n_h * th

    w1p = jnp.pad(w1, ((0, D_pad - D), (0, H_pad - H))).astype(compute_dtype)
    w2p = jnp.pad(w2, ((0, H_pad - H), (0, D_pad - D))).astype(compute_dtype)
    b1p = jnp.pad(b1, (0, H_pad - H)).reshape(1, H_pad).astype(jnp.float32)
    b2p = jnp.pad(b2, (0, D_pad - D)).reshape(1, D_pad).astype(jnp.float32)

    return dict(w1=w1p, b1=b1p, w2=w2p, b2=b2p,
                D=D, H=H, D_pad=D_pad, H_pad=H_pad, th=th,
                compute_dtype=compute_dtype)


# ----------------------------------------------------------------------------
# Apply
# ----------------------------------------------------------------------------
def mlp_block_apply(x, params, *, tm=None, approximate_gelu=False):
    """x: (..., D). params: output of prepare_mlp_block_params."""
    D, D_pad = params["D"], params["D_pad"]
    H_pad, th = params["H_pad"], params["th"]
    compute_dtype = params["compute_dtype"]

    orig_shape = x.shape
    assert orig_shape[-1] == D, "last dim of x must equal embedding_dim"
    out_dtype = jnp.dtype(x.dtype)
    use_scratch = out_dtype != jnp.dtype(jnp.float32)

    x2 = x.reshape(-1, D)
    M = x2.shape[0]

    c_size = compute_dtype.itemsize
    x_size = out_dtype.itemsize
    o_size = out_dtype.itemsize
    # packed-sublane minimum for the MXU operand dtype.
    min_rows = 8 if c_size >= 4 else (16 if c_size == 2 else 32)

    if tm is None:
        tm = _default_row_tile()
    M_round = _round_up(M, min_rows)
    tm_eff = min(tm, M_round)
    # Ensure >= 2 row tiles when M is big enough, so the "parallel" row axis
    # actually feeds both TensorCores on megacore parts (v7x).
    if M_round // tm_eff < 2 and M_round >= 512:
        tm_eff = _round_up(_cdiv(M_round, 2), min_rows)

    def _vmem_bytes(tm_):
        b = 2 * tm_ * D_pad * x_size            # x double buffer
        b += 2 * D_pad * th * c_size            # W1 double buffer
        b += 2 * th * D_pad * c_size            # W2 double buffer
        b += 2 * (th + D_pad) * 4               # biases
        b += 2 * tm_ * D_pad * o_size           # output double buffer
        if use_scratch:
            b += tm_ * D_pad * 4                # f32 accumulator
        return b

    VMEM_BUDGET = 48 << 20                      # safe on v5e/v6e/v7x
    while tm_eff > min_rows and _vmem_bytes(tm_eff) > VMEM_BUDGET:
        tm_eff = max(min_rows, _round_up(tm_eff // 2, min_rows))

    M_pad = _round_up(M, tm_eff)
    if (M_pad, D_pad) != (M, D):
        x2 = jnp.pad(x2, ((0, M_pad - M), (0, D_pad - D)))

    grid = (M_pad // tm_eff, H_pad // th)
    grid_i = grid[0]

    cost = pl.CostEstimate(
        flops=4 * M_pad * D_pad * H_pad,          # two matmuls, 2 flops/MAC
        transcendentals=M_pad * H_pad,            # GELU
        bytes_accessed=int(
            M_pad * D_pad * x_size                           # x read
            + M_pad * D_pad * o_size                         # y write
            + grid_i * (2 * D_pad * H_pad * c_size           # W1+W2 per row tile
                        + (H_pad + D_pad) * 4)),             # biases per row tile
    )

    kernel = functools.partial(_mlp_block_kernel,
                               compute_dtype=compute_dtype,
                               approximate_gelu=approximate_gelu)

    scratch_shapes = ([pltpu.VMEM((tm_eff, D_pad), jnp.float32)]
                      if use_scratch else [])

    vmem_limit = int(min(56 << 20, max(32 << 20, _vmem_bytes(tm_eff) + (4 << 20))))

    out = pl.pallas_call(
        kernel,
        out_shape=jax.ShapeDtypeStruct((M_pad, D_pad), out_dtype),
        grid_spec=pltpu.PrefetchScalarGridSpec(
            num_scalar_prefetch=0,
            grid=grid,
            in_specs=[
                pl.BlockSpec((tm_eff, D_pad), lambda i, j: (i, 0)),  # x rows
                pl.BlockSpec((D_pad, th),     lambda i, j: (0, j)),  # W1 tile
                pl.BlockSpec((1, th),         lambda i, j: (0, j)),  # b1 tile
                pl.BlockSpec((th, D_pad),     lambda i, j: (j, 0)),  # W2 tile
                pl.BlockSpec((1, D_pad),      lambda i, j: (0, 0)),  # b2
            ],
            out_specs=pl.BlockSpec((tm_eff, D_pad), lambda i, j: (i, 0)),
            scratch_shapes=scratch_shapes,
        ),
        compiler_params=pltpu.CompilerParams(
            # row axis shards across TensorCores; hidden axis is a reduction
            # carried in the resident output tile / f32 accumulator.
            dimension_semantics=("parallel", "arbitrary"),
            vmem_limit_bytes=vmem_limit),
        cost_estimate=cost,
    )(x2, params["w1"], params["b1"], params["w2"], params["b2"])

    if (M_pad, D_pad) != (M, D):
        out = out[:M, :D]
    return out.reshape(orig_shape)


def mlp_block(x, w1, b1, w2, b2, *, compute_dtype=jnp.bfloat16, tm=None,
              th_target=1024, approximate_gelu=False):
    """One-shot convenience: pads/casts weights then applies the block.

    For repeated calls (e.g. every transformer layer / step), call
    prepare_mlp_block_params once and reuse the result with mlp_block_apply.
    """
    params = prepare_mlp_block_params(w1, b1, w2, b2,
                                      compute_dtype=compute_dtype,
                                      th_target=th_target)
    return mlp_block_apply(x, params, tm=tm, approximate_gelu=approximate_gelu)


def _reference(x, w1, b1, w2, b2):
    h = jnp.dot(x, w1) + b1
    h = 0.5 * h * (1.0 + lax.erf(h / math.sqrt(2.0)))
    return jnp.dot(h, w2) + b2


if __name__ == "__main__":
    # Small shapes consistent with MLPBlock: tokens (B, N, embedding_dim)
    B, N = 2, 8
    embedding_dim, mlp_dim = 32, 64

    key = jax.random.PRNGKey(0)
    kx, k1, k2, k3, k4 = jax.random.split(key, 5)

    x = jax.random.normal(kx, (B, N, embedding_dim), dtype=jnp.float32)

    # Deterministic parameter init (stored as (in, out), i.e. W.T of torch Linear)
    w1 = jax.random.normal(k1, (embedding_dim, mlp_dim), jnp.float32) * 0.02
    b1 = jax.random.normal(k2, (mlp_dim,), jnp.float32) * 0.01
    w2 = jax.random.normal(k3, (mlp_dim, embedding_dim), jnp.float32) * 0.02
    b2 = jax.random.normal(k4, (embedding_dim,), jnp.float32) * 0.01

    y_ref = _reference(x, w1, b1, w2, b2)

    # Default path: bf16 matmul operands, f32 accumulation (prepare once, apply).
    params_bf16 = prepare_mlp_block_params(w1, b1, w2, b2,
                                           compute_dtype=jnp.bfloat16)
    y_bf16 = mlp_block_apply(x, params_bf16)
    jax.block_until_ready(y_bf16)
    assert y_bf16.shape == x.shape
    assert jnp.allclose(y_bf16, y_ref, atol=2e-2, rtol=2e-2), \
        "bf16 compute path mismatch vs reference"

    # f32 compute path: bit-tight against the f32 reference.
    y_f32 = mlp_block(x, w1, b1, w2, b2, compute_dtype=jnp.float32)
    jax.block_until_ready(y_f32)
    assert jnp.allclose(y_f32, y_ref, atol=1e-5, rtol=1e-5), \
        "f32 compute path mismatch vs reference"

    # bf16 activations in / bf16 out: exercises the f32-accumulator-scratch path.
    y_b = mlp_block(x.astype(jnp.bfloat16), w1, b1, w2, b2)
    jax.block_until_ready(y_b)
    assert y_b.dtype == jnp.bfloat16
    assert jnp.allclose(y_b.astype(jnp.float32), y_ref, atol=3e-2, rtol=3e-2), \
        "bf16 activation path mismatch vs reference"

    print("KERNEL_OK")
</pallas_src>

<mosaic_0001>
module attributes {stable_mosaic.version = 11 : i64} {
  func.func @_mlp_block_kernel(%arg0: i32, %arg1: i32, %arg2: memref<16x128xf32, #tpu.memory_space<vmem>>, %arg3: memref<128x128xbf16, #tpu.memory_space<vmem>>, %arg4: memref<1x128xf32, #tpu.memory_space<vmem>>, %arg5: memref<128x128xbf16, #tpu.memory_space<vmem>>, %arg6: memref<1x128xf32, #tpu.memory_space<vmem>>, %arg7: memref<16x128xf32, #tpu.memory_space<vmem>>) attributes {dimension_semantics = [#tpu.dimension_semantics<parallel>, #tpu.dimension_semantics<arbitrary>], iteration_bounds = array<i64: 1, 1>, scalar_prefetch = 0 : i64, scratch_operands = 0 : i64, tpu.core_type = #tpu.core_type<tc>, window_params = [{transform_indices = @transform_0, window_bounds = array<i64: 16, 128>}, {transform_indices = @transform_1, window_bounds = array<i64: 128, 128>}, {transform_indices = @transform_2, window_bounds = array<i64: 1, 128>}, {transform_indices = @transform_3, window_bounds = array<i64: 128, 128>}, {pipeline_mode = #tpu.pipeline_mode<synchronous>, transform_indices = @transform_4, window_bounds = array<i64: 1, 128>}, {transform_indices = @transform_5, window_bounds = array<i64: 16, 128>}]} {
    %c0_i32 = arith.constant 0 : i32
    %0 = arith.cmpi eq, %arg1, %c0_i32 : i32
    %1 = arith.extui %0 : i1 to i32
    %c0_i32_0 = arith.constant 0 : i32
    %2 = arith.cmpi ne, %1, %c0_i32_0 : i32
    scf.if %2 {
      %cst_18 = arith.constant 0.000000e+00 : f32
      %27 = vector.broadcast %cst_18 : f32 to vector<16x128xf32>
      %c0_19 = arith.constant 0 : index
      %c0_20 = arith.constant 0 : index
      %28 = vector.load %arg7[%c0_19, %c0_20] : memref<16x128xf32, #tpu.memory_space<vmem>>, vector<16x128xf32>
      tpu.vector_store %arg7[%c0_19, %c0_20], %27 {strides = array<i32>} : memref<16x128xf32, #tpu.memory_space<vmem>>, vector<16x128xf32>,
    } else {
    }
    %c0 = arith.constant 0 : index
    %c0_1 = arith.constant 0 : index
    %3 = vector.load %arg2[%c0, %c0_1] : memref<16x128xf32, #tpu.memory_space<vmem>>, vector<16x128xf32>
    %4 = arith.truncf %3 : vector<16x128xf32> to vector<16x128xbf16>
    %c0_2 = arith.constant 0 : index
    %c0_3 = arith.constant 0 : index
    %5 = vector.load %arg3[%c0_2, %c0_3] : memref<128x128xbf16, #tpu.memory_space<vmem>>, vector<128x128xbf16>
    %cst = arith.constant dense<0.000000e+00> : vector<16x128xf32>
    %6 = tpu.matmul %4, %5, %cst {dimension_numbers = #tpu.dot_dimension_numbers<[1], [0], [0], [1], [0, 0, 1, 1], [], []>} : vector<16x128xbf16>, vector<128x128xbf16>, vector<16x128xf32> -> vector<16x128xf32>
    %c0_4 = arith.constant 0 : index
    %c0_5 = arith.constant 0 : index
    %7 = vector.load %arg4[%c0_4, %c0_5] : memref<1x128xf32, #tpu.memory_space<vmem>>, vector<1x128xf32>
    %8 = vector.broadcast %7 : vector<1x128xf32> to vector<16x128xf32>
    %9 = arith.addf %6, %8 : vector<16x128xf32>
    %cst_6 = arith.constant 5.000000e-01 : f32
    %10 = vector.broadcast %cst_6 : f32 to vector<16x128xf32>
    %11 = arith.mulf %10, %9 : vector<16x128xf32>
    %cst_7 = arith.constant 0.707106769 : f32
    %12 = vector.broadcast %cst_7 : f32 to vector<16x128xf32>
    %13 = arith.mulf %9, %12 : vector<16x128xf32>
    %14 = math.erf %13 : vector<16x128xf32>
    %cst_8 = arith.constant 1.000000e+00 : f32
    %15 = vector.broadcast %cst_8 : f32 to vector<16x128xf32>
    %16 = arith.addf %15, %14 : vector<16x128xf32>
    %17 = arith.mulf %11, %16 : vector<16x128xf32>
    %c0_9 = arith.constant 0 : index
    %c0_10 = arith.constant 0 : index
    %18 = vector.load %arg7[%c0_9, %c0_10] : memref<16x128xf32, #tpu.memory_space<vmem>>, vector<16x128xf32>
    %19 = arith.truncf %17 : vector<16x128xf32> to vector<16x128xbf16>
    %c0_11 = arith.constant 0 : index
    %c0_12 = arith.constant 0 : index
    %20 = vector.load %arg5[%c0_11, %c0_12] : memref<128x128xbf16, #tpu.memory_space<vmem>>, vector<128x128xbf16>
    %cst_13 = arith.constant dense<0.000000e+00> : vector<16x128xf32>
    %21 = tpu.matmul %19, %20, %cst_13 {dimension_numbers = #tpu.dot_dimension_numbers<[1], [0], [0], [1], [0, 0, 1, 1], [], []>} : vector<16x128xbf16>, vector<128x128xbf16>, vector<16x128xf32> -> vector<16x128xf32>
    %22 = arith.addf %18, %21 : vector<16x128xf32>
    %c0_14 = arith.constant 0 : index
    %c0_15 = arith.constant 0 : index
    %23 = vector.load %arg7[%c0_14, %c0_15] : memref<16x128xf32, #tpu.memory_space<vmem>>, vector<16x128xf32>
    tpu.vector_store %arg7[%c0_14, %c0_15], %22 {strides = array<i32>} : memref<16x128xf32, #tpu.memory_space<vmem>>, vector<16x128xf32>,
    %c0_i32_16 = arith.constant 0 : i32
    %24 = arith.cmpi eq, %arg1, %c0_i32_16 : i32
    %25 = arith.extui %24 : i1 to i32
    %c0_i32_17 = arith.constant 0 : i32
    %26 = arith.cmpi ne, %25, %c0_i32_17 : i32
    scf.if %26 {
      %c0_18 = arith.constant 0 : index
      %c0_19 = arith.constant 0 : index
      %27 = vector.load %arg7[%c0_18, %c0_19] : memref<16x128xf32, #tpu.memory_space<vmem>>, vector<16x128xf32>
      %c0_20 = arith.constant 0 : index
      %c0_21 = arith.constant 0 : index
      %28 = vector.load %arg6[%c0_20, %c0_21] : memref<1x128xf32, #tpu.memory_space<vmem>>, vector<1x128xf32>
      %29 = vector.broadcast %28 : vector<1x128xf32> to vector<16x128xf32>
      %30 = arith.addf %27, %29 : vector<16x128xf32>
      %c0_22 = arith.constant 0 : index
      %c0_23 = arith.constant 0 : index
      %31 = vector.load %arg7[%c0_22, %c0_23] : memref<16x128xf32, #tpu.memory_space<vmem>>, vector<16x128xf32>
      tpu.vector_store %arg7[%c0_22, %c0_23], %30 {strides = array<i32>} : memref<16x128xf32, #tpu.memory_space<vmem>>, vector<16x128xf32>,
    } else {
    }
    return
  }
  func.func @transform_0(%arg0: i32, %arg1: i32) -> (i32, i32) {
    %c0_i32 = arith.constant 0 : i32
    %c0_i32_0 = arith.constant 0 : i32
    return %arg0, %c0_i32 : i32, i32
  }
  func.func @transform_1(%arg0: i32, %arg1: i32) -> (i32, i32) {
    %c0_i32 = arith.constant 0 : i32
    %c0_i32_0 = arith.constant 0 : i32
    return %c0_i32, %arg1 : i32, i32
  }
  func.func @transform_2(%arg0: i32, %arg1: i32) -> (i32, i32) {
    %c0_i32 = arith.constant 0 : i32
    %c0_i32_0 = arith.constant 0 : i32
    return %c0_i32, %arg1 : i32, i32
  }
  func.func @transform_3(%arg0: i32, %arg1: i32) -> (i32, i32) {
    %c0_i32 = arith.constant 0 : i32
    %c0_i32_0 = arith.constant 0 : i32
    return %arg1, %c0_i32 : i32, i32
  }
  func.func @transform_4(%arg0: i32, %arg1: i32) -> (i32, i32) {
    %c0_i32 = arith.constant 0 : i32
    %c0_i32_0 = arith.constant 0 : i32
    %c0_i32_1 = arith.constant 0 : i32
    return %c0_i32, %c0_i32_0 : i32, i32
  }
  func.func @transform_5(%arg0: i32, %arg1: i32) -> (i32, i32) {
    %c0_i32 = arith.constant 0 : i32
    %c0_i32_0 = arith.constant 0 : i32
    return %arg0, %c0_i32 : i32, i32
  }
}

</mosaic_0001>

<llo_original>
// kernel: tpu_custom_call.1
$region0: #{tpu_custom_call.1}
  #allocation0 [shape = 'u32[]', space=smem, size = 0x4, offset = 0x4, fixed_abs, tag = 'smem constant byte address 0x4 - core index']
  #allocation1 [shape = 'u32[144,128]{1,0:T(1,128)}', space=vmem, size = 0x12000, scoped, tag = 'internal scratch']
  %s0 = inlined_call_operand.hbm [shape: f32[16,128], index: 0, kind: input, shape index: {}]
  %s1 = inlined_call_operand.hbm [shape: bf16[128,128], index: 1, kind: input, shape index: {}]
  %s2 = inlined_call_operand.vmem [shape: f32[1,128], index: 2, kind: input, shape index: {}]
  %s3 = inlined_call_operand.hbm [shape: bf16[128,128], index: 3, kind: input, shape index: {}]
  %s4 = inlined_call_operand.vmem [shape: f32[1,128], index: 4, kind: input, shape index: {}]
  %s5 = inlined_call_operand.hbm [shape: f32[16,128], index: 5, kind: output, shape index: {}]
  %s6 = sld [smem:[#allocation0]]
  $region50: #{tpu_custom_call.1} parent=0
    _
  %s8 = ssub.s32 1, %s6
  %s9 = scalar_select 0, %s8, %s6
  $region1: #{tpu_custom_call.1} parent=0
    #allocation2 [shape = 'u8[8192]{0}', space=vmem, size = 0x2000, scoped, tag = 'input window, operand 0, single buffered']
    #allocation3 [shape = 's32[1]{0}', space=sflag, size = 0x4, scoped, tag = 'scoped memory for tpu_custom_call.1']
    #allocation4 [shape = 's32[1]{0}', space=sflag, size = 0x4, scoped, tag = 'scoped memory for tpu_custom_call.1']
    #allocation5 [shape = 'u8[32768]{0}', space=vmem, size = 0x8000, scoped, tag = 'input window, operand 1, single buffered']
    #allocation6 [shape = 's32[1]{0}', space=sflag, size = 0x4, scoped, tag = 'scoped memory for tpu_custom_call.1']
    #allocation7 [shape = 'u8[32768]{0}', space=vmem, size = 0x8000, scoped, tag = 'input window, operand 3, single buffered']
    #allocation8 [shape = 'u8[8192]{0}', space=vmem, size = 0x2000, scoped, tag = 'output window, operand 0, single buffered']
    %10 = vsyncpa [#allocation3], 0
    %11 = vsyncpa [#allocation6], 0
    %12 = vsyncpa [#allocation4], 0
    // Predicated region
    $region2: #{tpu_custom_call.1} parent=1 // pred_check
      _
    $region3: #{tpu_custom_call.1} parent=1 // pred_check_branch
      %14 = sbr.rel (0) target = $region5
    $region4: #{tpu_custom_call.1} parent=1 // pred_region
      %s16 = ssub.s32 256, 256
      %17 = vsyncadd [#allocation3], %s16
      %s18 = sshll.u32 [#allocation2], 4
      %s19 = int_to_ptr.vmem [resolvable:$true] %s18
      %24 = dma.hbm_to_vmem [thread:$0]  %s0, 256, %s19, [#allocation3], 128, 128, 8
    $region5: #{tpu_custom_call.1} parent=1 // pred_fallthru
      _
    // Predicated region
    $region6: #{tpu_custom_call.1} parent=1 // pred_check
      _
    $region7: #{tpu_custom_call.1} parent=1 // pred_check_branch
      %26 = sbr.rel (0) target = $region9
    $region8: #{tpu_custom_call.1} parent=1 // pred_region
      %s28 = ssub.s32 1024, 1024
      %29 = vsyncadd [#allocation6], %s28
      %s30 = sshll.u32 [#allocation5], 4
      %s31 = int_to_ptr.vmem [resolvable:$true] %s30
      %36 = dma.hbm_to_vmem [thread:$0]  %s1, 1024, %s31, [#allocation6], 64, 64, 4
    $region9: #{tpu_custom_call.1} parent=1 // pred_fallthru
      _
    // Predicated region
    $region10: #{tpu_custom_call.1} parent=1 // pred_check
      _
    $region11: #{tpu_custom_call.1} parent=1 // pred_check_branch
      %38 = sbr.rel (0) target = $region13
    $region12: #{tpu_custom_call.1} parent=1 // pred_region
      _
    $region13: #{tpu_custom_call.1} parent=1 // pred_fallthru
      _
    // Predicated region
    $region14: #{tpu_custom_call.1} parent=1 // pred_check
      _
    $region15: #{tpu_custom_call.1} parent=1 // pred_check_branch
      %40 = sbr.rel (0) target = $region17
    $region16: #{tpu_custom_call.1} parent=1 // pred_region
      %s42 = ssub.s32 1024, 1024
      %43 = vsyncadd [#allocation6], %s42
      %s44 = sshll.u32 [#allocation7], 4
      %s45 = int_to_ptr.vmem [resolvable:$true] %s44
      %50 = dma.hbm_to_vmem [thread:$0]  %s3, 1024, %s45, [#allocation6], 64, 64, 4
    $region17: #{tpu_custom_call.1} parent=1 // pred_fallthru
      _
    // Predicated region
    $region18: #{tpu_custom_call.1} parent=1 // pred_check
      _
    $region19: #{tpu_custom_call.1} parent=1 // pred_check_branch
      %52 = sbr.rel (0) target = $region21
    $region20: #{tpu_custom_call.1} parent=1 // pred_region
      _
    $region21: #{tpu_custom_call.1} parent=1 // pred_fallthru
      _
    // Predicated region
    $region22: #{tpu_custom_call.1} parent=1 // pred_check
      _
    $region23: #{tpu_custom_call.1} parent=1 // pred_check_branch
      %54 = sbr.rel (0) target = $region25
    $region24: #{tpu_custom_call.1} parent=1 // pred_region
      %55 = dma.done [#allocation3], 256
    $region25: #{tpu_custom_call.1} parent=1 // pred_fallthru
      _
    // Predicated region
    $region26: #{tpu_custom_call.1} parent=1 // pred_check
      _
    $region27: #{tpu_custom_call.1} parent=1 // pred_check_branch
      %57 = sbr.rel (0) target = $region29
    $region28: #{tpu_custom_call.1} parent=1 // pred_region
      %58 = dma.done [#allocation6], 1024
    $region29: #{tpu_custom_call.1} parent=1 // pred_fallthru
      _
    // Predicated region
    $region30: #{tpu_custom_call.1} parent=1 // pred_check
      _
    $region31: #{tpu_custom_call.1} parent=1 // pred_check_branch
      %60 = sbr.rel (0) target = $region33
    $region32: #{tpu_custom_call.1} parent=1 // pred_region
      %61 = dma.done [#allocation6], 1024
    $region33: #{tpu_custom_call.1} parent=1 // pred_fallthru
      _
    %p63 = scmp.eq.s32.totalorder 0, 0
    // Predicated region
    $region34: #{tpu_custom_call.1} parent=1 // pred_check
      %p64 = pneg %p63
    $region35: #{tpu_custom_call.1} parent=1 // pred_check_branch
      %66 = sbr.rel (%p64) target = $region37
    $region36: #{tpu_custom_call.1} parent=1 // pred_region
      %67 = vst [vmem:[#allocation8] sm:$0xff] 0.0
      %68 = vst [vmem:[#allocation8 + $0x8] sm:$0xff] 0.0
    $region37: #{tpu_custom_call.1} parent=1 // pred_fallthru
      _
    %v69 = vld [vmem:[#allocation2] sm:$0xff]
    %v70 = vld [vmem:[#allocation2 + $0x8] sm:$0xff]
    %v71 = vpack.c.bf16 %v70, %v69
    %v72 = vld [vmem:[#allocation5] sm:$0xf]
    %v73 = vld [vmem:[#allocation5 + $0x4] sm:$0xf]
    %v74 = vld [vmem:[#allocation5 + $0x8] sm:$0xf]
    %v75 = vld [vmem:[#allocation5 + $0xc] sm:$0xf]
    %v76 = vld [vmem:[#allocation5 + $0x10] sm:$0xf]
    %v77 = vld [vmem:[#allocation5 + $0x14] sm:$0xf]
    %v78 = vld [vmem:[#allocation5 + $0x18] sm:$0xf]
    %v79 = vld [vmem:[#allocation5 + $0x1c] sm:$0xf]
    %v80 = vld [vmem:[#allocation5 + $0x20] sm:$0xf]
    %v81 = vld [vmem:[#allocation5 + $0x24] sm:$0xf]
    %v82 = vld [vmem:[#allocation5 + $0x28] sm:$0xf]
    %v83 = vld [vmem:[#allocation5 + $0x2c] sm:$0xf]
    %v84 = vld [vmem:[#allocation5 + $0x30] sm:$0xf]
    %v85 = vld [vmem:[#allocation5 + $0x34] sm:$0xf]
    %v86 = vld [vmem:[#allocation5 + $0x38] sm:$0xf]
    %v87 = vld [vmem:[#allocation5 + $0x3c] sm:$0xf]
    %v88 = vld [vmem:[%s2] sm:$0x1]
    %v90 = vlaneseq
    %v91 = vshrl.u32 %v90, 7
    %v92 = vsub.s32 0, %v91
    %v93 = vrot.slane %v88, %v92
    %v111 = vunpack.c.l.b16 %v72
    %v112 = vunpack.c.l.b16 %v73
    %v113 = vunpack.c.l.b16 %v74
    %v114 = vunpack.c.l.b16 %v75
    %v115 = vunpack.c.l.b16 %v76
    %v116 = vunpack.c.l.b16 %v77
    %v117 = vunpack.c.l.b16 %v78
    %v118 = vunpack.c.l.b16 %v79
    %v119 = vunpack.c.l.b16 %v80
    %v120 = vunpack.c.l.b16 %v81
    %v121 = vunpack.c.l.b16 %v82
    %v122 = vunpack.c.l.b16 %v83
    %v123 = vunpack.c.l.b16 %v84
    %v124 = vunpack.c.l.b16 %v85
    %v125 = vunpack.c.l.b16 %v86
    %v126 = vunpack.c.l.b16 %v87
    %v127 = vpack.c.b16 %v112, %v111
    %v128 = vpack.c.b16 %v114, %v113
    %v129 = vpack.c.b16 %v116, %v115
    %v130 = vpack.c.b16 %v118, %v117
    %v131 = vpack.c.b16 %v120, %v119
    %v132 = vpack.c.b16 %v122, %v121
    %v133 = vpack.c.b16 %v124, %v123
    %v134 = vpack.c.b16 %v126, %v125
    %143 = vmatprep.subr.bf16.mxu0 0
    %144 = vmatpush1.bf16.msra.mxu0 %v127
    %145 = vmatprep.subr.bf16.mxu0 0
    %146 = vmatpush1.bf16.msra.mxu0 %v128
    %147 = vmatprep.subr.bf16.mxu0 0
    %148 = vmatpush1.bf16.msra.mxu0 %v129
    %149 = vmatprep.subr.bf16.mxu0 0
    %150 = vmatpush1.bf16.msra.mxu0 %v130
    %151 = vmatprep.subr.bf16.mxu0 0
    %152 = vmatpush1.bf16.msra.mxu0 %v131
    %153 = vmatprep.subr.bf16.mxu0 0
    %154 = vmatpush1.bf16.msra.mxu0 %v132
    %155 = vmatprep.subr.bf16.mxu0 0
    %156 = vmatpush1.bf16.msra.mxu0 %v133
    %157 = vmatprep.subr.bf16.mxu0 0
    %158 = vmatpush1.bf16.msra.mxu0 %v134
    %159 = vmatprep.subr.bf16.mxu0 0
    %160 = vmatpush1.bf16.msra.mxu0 0
    %161 = vmatprep.subr.bf16.mxu0 0
    %162 = vmatpush1.bf16.msra.mxu0 0
    %163 = vmatprep.subr.bf16.mxu0 0
    %164 = vmatpush1.bf16.msra.mxu0 0
    %165 = vmatprep.subr.bf16.mxu0 0
    %166 = vmatpush1.bf16.msra.mxu0 0
    %167 = vmatprep.subr.bf16.mxu0 0
    %168 = vmatpush1.bf16.msra.mxu0 0
    %169 = vmatprep.subr.bf16.mxu0 0
    %170 = vmatpush1.bf16.msra.mxu0 0
    %171 = vmatprep.subr.bf16.mxu0 0
    %172 = vmatpush1.bf16.msra.mxu0 0
    %173 = vmatprep.subr.bf16.mxu0 0
    %174 = vmatpush1.bf16.msra.mxu0 0
    %175 = vmatprep.mubr.bf16.mxu0 0
    %176 = vmatmul.mubr.bf16.gmra.mrb[0].mxu0 %v71
    %v177 = vpop.f32.mrb[0].mxu0
    %v178 = vadd.f32 %v93, %v177
    %v179 = vpop.f32.mrb[0].mxu0
    %v180 = vpop.f32.mrb[0].mxu0
    %v181 = vadd.f32 %v93, %v180
    %v182 = vpop.f32.mrb[0].mxu0
    %183 = vdwg.mxu0
    %v184 = vmul.f32 %v178, 0.5
    %v185 = vmul.f32 %v181, 0.5
    %v186 = vmul.f32 %v178, 0.70710677
    %v187 = vmul.f32 %v181, 0.70710677
    %v188 = verf.f32.pop %v186
    %v189 = verf.f32.pop %v187
    %v190 = vadd.f32 %v188, 1.0
    %v191 = vadd.f32 %v189, 1.0
    %v192 = vmul.f32 %v184, %v190
    %v193 = vmul.f32 %v185, %v191
    %v194 = vld [vmem:[#allocation8] sm:$0xff]
    %v195 = vld [vmem:[#allocation8 + $0x8] sm:$0xff]
    %v196 = vpack.c.bf16 %v193, %v192
    %v197 = vld [vmem:[#allocation7] sm:$0xf]
    %v198 = vld [vmem:[#allocation7 + $0x4] sm:$0xf]
    %v199 = vld [vmem:[#allocation7 + $0x8] sm:$0xf]
    %v200 = vld [vmem:[#allocation7 + $0xc] sm:$0xf]
    %v201 = vld [vmem:[#allocation7 + $0x10] sm:$0xf]
    %v202 = vld [vmem:[#allocation7 + $0x14] sm:$0xf]
    %v203 = vld [vmem:[#allocation7 + $0x18] sm:$0xf]
    %v204 = vld [vmem:[#allocation7 + $0x1c] sm:$0xf]
    %v205 = vld [vmem:[#allocation7 + $0x20] sm:$0xf]
    %v206 = vld [vmem:[#allocation7 + $0x24] sm:$0xf]
    %v207 = vld [vmem:[#allocation7 + $0x28] sm:$0xf]
    %v208 = vld [vmem:[#allocation7 + $0x2c] sm:$0xf]
    %v209 = vld [vmem:[#allocation7 + $0x30] sm:$0xf]
    %v210 = vld [vmem:[#allocation7 + $0x34] sm:$0xf]
    %v211 = vld [vmem:[#allocation7 + $0x38] sm:$0xf]
    %v212 = vld [vmem:[#allocation7 + $0x3c] sm:$0xf]
    %v229 = vunpack.c.l.b16 %v197
    %v230 = vunpack.c.l.b16 %v198
    %v231 = vunpack.c.l.b16 %v199
    %v232 = vunpack.c.l.b16 %v200
    %v233 = vunpack.c.l.b16 %v201
    %v234 = vunpack.c.l.b16 %v202
    %v235 = vunpack.c.l.b16 %v203
    %v236 = vunpack.c.l.b16 %v204
    %v237 = vunpack.c.l.b16 %v205
    %v238 = vunpack.c.l.b16 %v206
    %v239 = vunpack.c.l.b16 %v207
    %v240 = vunpack.c.l.b16 %v208
    %v241 = vunpack.c.l.b16 %v209
    %v242 = vunpack.c.l.b16 %v210
    %v243 = vunpack.c.l.b16 %v211
    %v244 = vunpack.c.l.b16 %v212
    %v245 = vpack.c.b16 %v230, %v229
    %v246 = vpack.c.b16 %v232, %v231
    %v247 = vpack.c.b16 %v234, %v233
    %v248 = vpack.c.b16 %v236, %v235
    %v249 = vpack.c.b16 %v238, %v237
    %v250 = vpack.c.b16 %v240, %v239
    %v251 = vpack.c.b16 %v242, %v241
    %v252 = vpack.c.b16 %v244, %v243
    %261 = vmatprep.subr.bf16.mxu0 0
    %262 = vmatpush1.bf16.msra.mxu0 %v245
    %263 = vmatprep.subr.bf16.mxu0 0
    %264 = vmatpush1.bf16.msra.mxu0 %v246
    %265 = vmatprep.subr.bf16.mxu0 0
    %266 = vmatpush1.bf16.msra.mxu0 %v247
    %267 = vmatprep.subr.bf16.mxu0 0
    %268 = vmatpush1.bf16.msra.mxu0 %v248
    %269 = vmatprep.subr.bf16.mxu0 0
    %270 = vmatpush1.bf16.msra.mxu0 %v249
    %271 = vmatprep.subr.bf16.mxu0 0
    %272 = vmatpush1.bf16.msra.mxu0 %v250
    %273 = vmatprep.subr.bf16.mxu0 0
    %274 = vmatpush1.bf16.msra.mxu0 %v251
    %275 = vmatprep.subr.bf16.mxu0 0
    %276 = vmatpush1.bf16.msra.mxu0 %v252
    %277 = vmatprep.subr.bf16.mxu0 0
    %278 = vmatpush1.bf16.msra.mxu0 0
    %279 = vmatprep.subr.bf16.mxu0 0
    %280 = vmatpush1.bf16.msra.mxu0 0
    %281 = vmatprep.subr.bf16.mxu0 0
    %282 = vmatpush1.bf16.msra.mxu0 0
    %283 = vmatprep.subr.bf16.mxu0 0
    %284 = vmatpush1.bf16.msra.mxu0 0
    %285 = vmatprep.subr.bf16.mxu0 0
    %286 = vmatpush1.bf16.msra.mxu0 0
    %287 = vmatprep.subr.bf16.mxu0 0
    %288 = vmatpush1.bf16.msra.mxu0 0
    %289 = vmatprep.subr.bf16.mxu0 0
    %290 = vmatpush1.bf16.msra.mxu0 0
    %291 = vmatprep.subr.bf16.mxu0 0
    %292 = vmatpush1.bf16.msra.mxu0 0
    %293 = vmatprep.mubr.bf16.mxu0 0
    %294 = vmatmul.mubr.bf16.gmra.mrb[0].mxu0 %v196
    %v295 = vpop.f32.mrb[0].mxu0
    %v296 = vadd.f32 0.0, %v295
    %v297 = vpop.f32.mrb[0].mxu0
    %v298 = vpop.f32.mrb[0].mxu0
    %v299 = vadd.f32 0.0, %v298
    %v300 = vpop.f32.mrb[0].mxu0
    %301 = vdwg.mxu0
    %v302 = vadd.f32 %v194, %v296
    %v303 = vadd.f32 %v195, %v299
    %304 = vst [vmem:[#allocation8] sm:$0xff] %v302
    %305 = vst [vmem:[#allocation8 + $0x8] sm:$0xff] %v303
    // Predicated region
    $region38: #{tpu_custom_call.1} parent=1 // pred_check
      %p306 = pneg %p63
    $region39: #{tpu_custom_call.1} parent=1 // pred_check_branch
      %308 = sbr.rel (%p306) target = $region41
    $region40: #{tpu_custom_call.1} parent=1 // pred_region
      %v309 = vld [vmem:[#allocation8] sm:$0xff]
      %v310 = vld [vmem:[#allocation8 + $0x8] sm:$0xff]
      %v311 = vld [vmem:[%s4] sm:$0x1]
      %v313 = vlaneseq
      %v314 = vshrl.u32 %v313, 7
      %v315 = vsub.s32 0, %v314
      %v316 = vrot.slane %v311, %v315
      %v318 = vadd.f32 %v309, %v316
      %v319 = vadd.f32 %v310, %v316
      %320 = vst [vmem:[#allocation8] sm:$0xff] %v318
      %321 = vst [vmem:[#allocation8 + $0x8] sm:$0xff] %v319
    $region41: #{tpu_custom_call.1} parent=1 // pred_fallthru
      _
    // Predicated region
    $region42: #{tpu_custom_call.1} parent=1 // pred_check
      _
    $region43: #{tpu_custom_call.1} parent=1 // pred_check_branch
      %323 = sbr.rel (0) target = $region45
    $region44: #{tpu_custom_call.1} parent=1 // pred_region
      %s325 = ssub.s32 256, 256
      %326 = vsyncadd [#allocation4], %s325
      %s327 = sshll.u32 [#allocation8], 4
      %s328 = int_to_ptr.vmem [resolvable:$true] %s327
      %333 = dma.vmem_to_hbm [thread:$0]  %s328, 256, %s5, [#allocation4], 128, 128, 8
    $region45: #{tpu_custom_call.1} parent=1 // pred_fallthru
      _
    // Predicated region
    $region46: #{tpu_custom_call.1} parent=1 // pred_check
      _
    $region47: #{tpu_custom_call.1} parent=1 // pred_check_branch
      %335 = sbr.rel (0) target = $region49
    $region48: #{tpu_custom_call.1} parent=1 // pred_region
      %336 = dma.done [#allocation4], 256
    $region49: #{tpu_custom_call.1} parent=1 // pred_fallthru
      _
    %337 = vsyncpa [#allocation3], 1
    %338 = vsyncpa [#allocation6], 1
    %339 = vsyncpa [#allocation4], 1

</llo_original>
